<compile_context>
chip_gen: v5e
topology: v5e:2x2
jax: 0.10.0
libtpu: 0.0.40
codegen_flags: <defaults>
</compile_context>

<pallas_src>
import functools

import jax
import jax.numpy as jnp
from jax import lax
from jax.experimental import pallas as pl
from jax.experimental.pallas import tpu as pltpu


# One f32 vreg per grid step for the per-tile partial sum (lane/sublane aligned
# so the output stores are plain unmasked vst and the grid axis stays parallel).
PARTIAL_BLOCK = (8, 128)


# ----------------------------------------------------------------------------
# Kernels
# ----------------------------------------------------------------------------
def _softmax_last(x):
    """Numerically-stable softmax along the last axis (matches F.softmax)."""
    m = jnp.max(x, axis=-1, keepdims=True)
    e = jnp.exp(x - m)
    # Exact reciprocal keeps us within the 1e-5 self-test tolerance.
    return e * pl.reciprocal(jnp.sum(e, axis=-1, keepdims=True), approx=False)


def _write_partial(out_ref, partial):
    # Broadcast the scalar over the aligned slab; the wrapper reads [:, 0, 0].
    out_ref[...] = jnp.full((1,) + PARTIAL_BLOCK, partial, dtype=jnp.float32)


def _aal_l1_kernel(x_ref, y_ref, out_ref, *, normalize):
    # x_ref, y_ref: (TILE_R, N) tile of the [B*C, H*W] layout.
    x = x_ref[...].astype(jnp.float32)
    y = y_ref[...].astype(jnp.float32)
    if normalize:
        x = _softmax_last(x)
        y = _softmax_last(y)
    # Zero-padded rows contribute exactly 0 (softmax(0)==softmax(0) or 0-0).
    _write_partial(out_ref, jnp.sum(jnp.abs(x - y)))


def _aal_cosine_kernel(x_ref, y_ref, out_ref, *, normalize, batch):
    # x_ref, y_ref: (TILE_B, C, N) tile of the [B, C, H*W] layout.
    x = x_ref[...].astype(jnp.float32)
    y = y_ref[...].astype(jnp.float32)
    tile_b = x.shape[0]
    if normalize:
        x = _softmax_last(x)
        y = _softmax_last(y)
    # F.normalize(p=2, dim=1):  x / max(||x||, eps)  ==  x * rsqrt(max(||x||^2, eps^2))
    # rsqrt runs on the EUP slot instead of burning VPU sqrt+divide.
    eps = jnp.float32(1e-12)
    xn = x * lax.rsqrt(jnp.maximum(jnp.sum(x * x, axis=1, keepdims=True), eps * eps))
    yn = y * lax.rsqrt(jnp.maximum(jnp.sum(y * y, axis=1, keepdims=True), eps * eps))
    loss = 1.0 - jnp.sum(xn * yn, axis=1, keepdims=True)  # (TILE_B, 1, N)
    # Mask out batch rows that only exist because of padding to a tile multiple.
    gidx = pl.program_id(0) * tile_b + lax.broadcasted_iota(
        jnp.int32, (tile_b, 1, 1), 0)
    loss = jnp.where(gidx < batch, loss, 0.0)
    _write_partial(out_ref, jnp.sum(loss))


# ----------------------------------------------------------------------------
# Wrapper (glue: reshape NCHW -> kernel layout, tiling, pallas_call setup)
# ----------------------------------------------------------------------------
def _round_up(v, m):
    return (v + m - 1) // m * m


def attention_alignment_loss(a_pred, a_gt, *, mode="l1", reduction="mean",
                             normalize=True,
                             target_tile_bytes=2 * 1024 * 1024):
    if mode not in ("l1", "cosine"):
        raise ValueError("Unsupported mode: choose from ['l1', 'cosine']")
    if reduction not in ("mean", "sum"):
        raise ValueError("Unsupported reduction: choose from ['mean', 'sum']")

    b, c, h, w = a_pred.shape
    n = h * w

    compiler_params = pltpu.CompilerParams(
        # Partial sums per tile are independent -> shard across v7x's 2 TCs.
        dimension_semantics=("parallel",),
        # Big enough for f32 temporaries + double-buffered tiles on every gen
        # (v5e default scoped limit is only 16 MiB); still < v7x's 64 MiB.
        vmem_limit_bytes=48 * 1024 * 1024,
    )

    if mode == "l1":
        rows = b * c
        x = a_pred.reshape(rows, n)
        y = a_gt.reshape(rows, n)
        # Rows per tile: multiple of 8 (f32 sublane), sized so a single f32
        # tile stays ~target_tile_bytes (softmax needs the whole last axis).
        tile_r = max(8, (target_tile_bytes // max(1, n * 4)) // 8 * 8)
        tile_r = min(tile_r, _round_up(rows, 8))
        rows_p = _round_up(rows, tile_r)
        if rows_p != rows:
            # Zero rows are loss-neutral for l1 in both normalize modes.
            x = jnp.pad(x, ((0, rows_p - rows), (0, 0)))
            y = jnp.pad(y, ((0, rows_p - rows), (0, 0)))
        num_tiles = rows_p // tile_r
        kernel = functools.partial(_aal_l1_kernel, normalize=normalize)
        in_spec = pl.BlockSpec((tile_r, n), lambda i: (i, 0))
        count = b * c * h * w
    else:  # cosine
        x = a_pred.reshape(b, c, n)
        y = a_gt.reshape(b, c, n)
        tile_b = max(1, min(b, target_tile_bytes // max(1, c * n * 4)))
        b_p = _round_up(b, tile_b)
        if b_p != b:
            # Padded batches are masked out inside the kernel.
            x = jnp.pad(x, ((0, b_p - b), (0, 0), (0, 0)))
            y = jnp.pad(y, ((0, b_p - b), (0, 0), (0, 0)))
        num_tiles = b_p // tile_b
        kernel = functools.partial(_aal_cosine_kernel, normalize=normalize,
                                   batch=b)
        in_spec = pl.BlockSpec((tile_b, c, n), lambda i: (i, 0, 0))
        count = b * h * w  # loss shape is [B, 1, H, W]

    partials = pl.pallas_call(
        kernel,
        grid=(num_tiles,),
        out_shape=jax.ShapeDtypeStruct((num_tiles,) + PARTIAL_BLOCK,
                                       jnp.float32),
        in_specs=[in_spec, in_spec],
        out_specs=pl.BlockSpec((1,) + PARTIAL_BLOCK, lambda i: (i, 0, 0)),
        compiler_params=compiler_params,
    )(x, y)

    # Tiny final reduction of per-tile partials on the XLA side (free).
    total = jnp.sum(partials[:, 0, 0])
    if reduction == "mean":
        total = total / jnp.float32(count)
    return total


# ----------------------------------------------------------------------------
# Pure-JAX reference (mirrors the PyTorch forward) for a sanity check.
# ----------------------------------------------------------------------------
def _reference(a_pred, a_gt, mode, reduction, normalize):
    b, c, h, w = a_pred.shape
    ap, ag = a_pred.astype(jnp.float32), a_gt.astype(jnp.float32)
    if normalize:
        ap = jax.nn.softmax(ap.reshape(b, c, -1), axis=-1).reshape(b, c, h, w)
        ag = jax.nn.softmax(ag.reshape(b, c, -1), axis=-1).reshape(b, c, h, w)
    if mode == "l1":
        loss = jnp.abs(ap - ag)
    else:
        eps = 1e-12
        apn = ap / jnp.maximum(jnp.linalg.norm(ap, axis=1, keepdims=True), eps)
        agn = ag / jnp.maximum(jnp.linalg.norm(ag, axis=1, keepdims=True), eps)
        loss = 1.0 - jnp.sum(apn * agn, axis=1, keepdims=True)
    return jnp.mean(loss) if reduction == "mean" else jnp.sum(loss)


if __name__ == "__main__":
    ok = True
    # Second config forces a multi-tile grid plus row/batch padding and the
    # in-kernel batch mask (B=3 with batch-tile 2, 12 rows with row-tile 8).
    configs = [
        ((2, 4, 16, 16), 2 * 1024 * 1024),
        ((3, 4, 16, 16), 8 * 1024),
    ]
    for idx, (shape, tile_bytes) in enumerate(configs):
        k1, k2 = jax.random.split(jax.random.fold_in(jax.random.PRNGKey(0), idx))
        a_pred = jax.random.normal(k1, shape, dtype=jnp.float32)
        a_gt = jax.random.normal(k2, shape, dtype=jnp.float32)
        for mode in ("l1", "cosine"):
            for reduction in ("mean", "sum"):
                for normalize in (True, False):
                    got = attention_alignment_loss(
                        a_pred, a_gt, mode=mode, reduction=reduction,
                        normalize=normalize, target_tile_bytes=tile_bytes)
                    got = jax.block_until_ready(got)
                    want = _reference(a_pred, a_gt, mode, reduction, normalize)
                    if not jnp.allclose(got, want, rtol=1e-5, atol=1e-5):
                        ok = False
                        print(f"MISMATCH shape={shape} mode={mode} "
                              f"reduction={reduction} normalize={normalize}: "
                              f"{got} vs {want}")
    if ok:
        print("KERNEL_OK")
</pallas_src>

<mosaic_0001>
module attributes {stable_mosaic.version = 11 : i64} {
  func.func @_aal_l1_kernel(%arg0: i32, %arg1: memref<8x256xf32, #tpu.memory_space<vmem>>, %arg2: memref<8x256xf32, #tpu.memory_space<vmem>>, %arg3: memref<1x8x128xf32, #tpu.memory_space<vmem>>) attributes {dimension_semantics = [#tpu.dimension_semantics<parallel>], iteration_bounds = array<i64: 1>, scalar_prefetch = 0 : i64, scratch_operands = 0 : i64, tpu.core_type = #tpu.core_type<tc>, window_params = [{transform_indices = @transform_0, window_bounds = array<i64: 8, 256>}, {transform_indices = @transform_1, window_bounds = array<i64: 8, 256>}, {transform_indices = @transform_2, window_bounds = array<i64: 1, 8, 128>}]} {
    %c0 = arith.constant 0 : index
    %c0_0 = arith.constant 0 : index
    %0 = vector.load %arg1[%c0, %c0_0] : memref<8x256xf32, #tpu.memory_space<vmem>>, vector<8x256xf32>
    %c0_1 = arith.constant 0 : index
    %c0_2 = arith.constant 0 : index
    %1 = vector.load %arg2[%c0_1, %c0_2] : memref<8x256xf32, #tpu.memory_space<vmem>>, vector<8x256xf32>
    %cst = arith.constant dense<0xFF800000> : vector<8xf32>
    %2 = vector.multi_reduction <maximumf>, %0, %cst [1] : vector<8x256xf32> to vector<8xf32>
    %3 = vector.shape_cast %2 : vector<8xf32> to vector<8x1xf32>
    %4 = vector.broadcast %3 : vector<8x1xf32> to vector<8x256xf32>
    %5 = arith.subf %0, %4 : vector<8x256xf32>
    %6 = math.exp %5 : vector<8x256xf32>
    %cst_3 = arith.constant dense<0.000000e+00> : vector<8xf32>
    %7 = vector.multi_reduction <add>, %6, %cst_3 [1] : vector<8x256xf32> to vector<8xf32>
    %8 = vector.shape_cast %7 : vector<8xf32> to vector<8x1xf32>
    %9 = tpu.reciprocal %8 : vector<8x1xf32> -> vector<8x1xf32>
    %10 = vector.broadcast %9 : vector<8x1xf32> to vector<8x256xf32>
    %11 = arith.mulf %6, %10 : vector<8x256xf32>
    %cst_4 = arith.constant dense<0xFF800000> : vector<8xf32>
    %12 = vector.multi_reduction <maximumf>, %1, %cst_4 [1] : vector<8x256xf32> to vector<8xf32>
    %13 = vector.shape_cast %12 : vector<8xf32> to vector<8x1xf32>
    %14 = vector.broadcast %13 : vector<8x1xf32> to vector<8x256xf32>
    %15 = arith.subf %1, %14 : vector<8x256xf32>
    %16 = math.exp %15 : vector<8x256xf32>
    %cst_5 = arith.constant dense<0.000000e+00> : vector<8xf32>
    %17 = vector.multi_reduction <add>, %16, %cst_5 [1] : vector<8x256xf32> to vector<8xf32>
    %18 = vector.shape_cast %17 : vector<8xf32> to vector<8x1xf32>
    %19 = tpu.reciprocal %18 : vector<8x1xf32> -> vector<8x1xf32>
    %20 = vector.broadcast %19 : vector<8x1xf32> to vector<8x256xf32>
    %21 = arith.mulf %16, %20 : vector<8x256xf32>
    %22 = arith.subf %11, %21 : vector<8x256xf32>
    %23 = math.absf %22 : vector<8x256xf32>
    %24 = vector.shape_cast %23 : vector<8x256xf32> to vector<1x8x256xf32>
    %cst_6 = arith.constant dense<0.000000e+00> : vector<1xf32>
    %25 = vector.multi_reduction <add>, %24, %cst_6 [1, 2] : vector<1x8x256xf32> to vector<1xf32>
    %26 = vector.shape_cast %25 : vector<1xf32> to vector<1x1x1xf32>
    %27 = vector.extract %26[0, 0, 0] : f32 from vector<1x1x1xf32>
    %28 = vector.broadcast %27 : f32 to vector<1x8x128xf32>
    %c0_7 = arith.constant 0 : index
    %c0_8 = arith.constant 0 : index
    %c0_9 = arith.constant 0 : index
    %29 = vector.load %arg3[%c0_7, %c0_8, %c0_9] : memref<1x8x128xf32, #tpu.memory_space<vmem>>, vector<1x8x128xf32>
    tpu.vector_store %arg3[%c0_7, %c0_8, %c0_9], %28 {strides = array<i32>} : memref<1x8x128xf32, #tpu.memory_space<vmem>>, vector<1x8x128xf32>,
    return
  }
  func.func @transform_0(%arg0: i32) -> (i32, i32) {
    %c0_i32 = arith.constant 0 : i32
    %c0_i32_0 = arith.constant 0 : i32
    return %arg0, %c0_i32 : i32, i32
  }
  func.func @transform_1(%arg0: i32) -> (i32, i32) {
    %c0_i32 = arith.constant 0 : i32
    %c0_i32_0 = arith.constant 0 : i32
    return %arg0, %c0_i32 : i32, i32
  }
  func.func @transform_2(%arg0: i32) -> (i32, i32, i32) {
    %c0_i32 = arith.constant 0 : i32
    %c0_i32_0 = arith.constant 0 : i32
    %c0_i32_1 = arith.constant 0 : i32
    return %arg0, %c0_i32, %c0_i32_0 : i32, i32, i32
  }
}

</mosaic_0001>

<llo_original>
// kernel: tpu_custom_call.1
$region0: #{tpu_custom_call.1}
  #allocation0 [shape = 'u32[]', space=smem, size = 0x4, offset = 0x4, fixed_abs, tag = 'smem constant byte address 0x4 - core index']
  #allocation1 [shape = 'u32[72,128]{1,0:T(1,128)}', space=vmem, size = 0x9000, scoped, tag = 'internal scratch']
  %s0 = inlined_call_operand.hbm [shape: f32[8,256], index: 0, kind: input, shape index: {}]
  %s1 = inlined_call_operand.hbm [shape: f32[8,256], index: 1, kind: input, shape index: {}]
  %s2 = inlined_call_operand.hbm [shape: f32[1,8,128], index: 2, kind: output, shape index: {}]
  %s3 = sld [smem:[#allocation0]]
  $region26: #{tpu_custom_call.1} parent=0
    _
  %s5 = ssub.s32 1, %s3
  %s6 = scalar_select 0, %s5, %s3
  $region1: #{tpu_custom_call.1} parent=0
    #allocation2 [shape = 'u8[8192]{0}', space=vmem, size = 0x2000, scoped, tag = 'input window, operand 0, single buffered']
    #allocation3 [shape = 's32[1]{0}', space=sflag, size = 0x4, scoped, tag = 'scoped memory for tpu_custom_call.1']
    #allocation4 [shape = 's32[1]{0}', space=sflag, size = 0x4, scoped, tag = 'scoped memory for tpu_custom_call.1']
    #allocation5 [shape = 'u8[8192]{0}', space=vmem, size = 0x2000, scoped, tag = 'input window, operand 1, single buffered']
    #allocation6 [shape = 's32[1]{0}', space=sflag, size = 0x4, scoped, tag = 'scoped memory for tpu_custom_call.1']
    #allocation7 [shape = 'u8[4096]{0}', space=vmem, size = 0x1000, scoped, tag = 'output window, operand 0, single buffered']
    %7 = vsyncpa [#allocation3], 0
    %8 = vsyncpa [#allocation6], 0
    %9 = vsyncpa [#allocation4], 0
    // Predicated region
    $region2: #{tpu_custom_call.1} parent=1 // pred_check
      _
    $region3: #{tpu_custom_call.1} parent=1 // pred_check_branch
      %11 = sbr.rel (0) target = $region5
    $region4: #{tpu_custom_call.1} parent=1 // pred_region
      %13 = vsyncadd [#allocation3], 0
      %s15 = sshll.u32 %s0, 4
      %s16 = int_to_ptr.hbm [resolvable:$true] %s15
      %s17 = sshll.u32 [#allocation2], 4
      %s18 = int_to_ptr.vmem [resolvable:$true] %s17
      %20 = dma.hbm_to_vmem [thread:$0]  %s16, 256, %s18, [#allocation3]
    $region5: #{tpu_custom_call.1} parent=1 // pred_fallthru
      _
    // Predicated region
    $region6: #{tpu_custom_call.1} parent=1 // pred_check
      _
    $region7: #{tpu_custom_call.1} parent=1 // pred_check_branch
      %22 = sbr.rel (0) target = $region9
    $region8: #{tpu_custom_call.1} parent=1 // pred_region
      %24 = vsyncadd [#allocation6], 0
      %s26 = sshll.u32 %s1, 4
      %s27 = int_to_ptr.hbm [resolvable:$true] %s26
      %s28 = sshll.u32 [#allocation5], 4
      %s29 = int_to_ptr.vmem [resolvable:$true] %s28
      %31 = dma.hbm_to_vmem [thread:$0]  %s27, 256, %s29, [#allocation6]
    $region9: #{tpu_custom_call.1} parent=1 // pred_fallthru
      _
    // Predicated region
    $region10: #{tpu_custom_call.1} parent=1 // pred_check
      _
    $region11: #{tpu_custom_call.1} parent=1 // pred_check_branch
      %33 = sbr.rel (0) target = $region13
    $region12: #{tpu_custom_call.1} parent=1 // pred_region
      %35 = dma.done [#allocation3], 256
    $region13: #{tpu_custom_call.1} parent=1 // pred_fallthru
      _
    // Predicated region
    $region14: #{tpu_custom_call.1} parent=1 // pred_check
      _
    $region15: #{tpu_custom_call.1} parent=1 // pred_check_branch
      %37 = sbr.rel (0) target = $region17
    $region16: #{tpu_custom_call.1} parent=1 // pred_region
      %39 = dma.done [#allocation6], 256
    $region17: #{tpu_custom_call.1} parent=1 // pred_fallthru
      _
    %v40 = vld [vmem:[#allocation2] sm:$0xff]
    %v41 = vld [vmem:[#allocation2 + $0x8] sm:$0xff]
    %v42 = vld [vmem:[#allocation5] sm:$0xff]
    %v43 = vld [vmem:[#allocation5 + $0x8] sm:$0xff]
    %v44 = vmax.f32 %v40, %v41
    %45 = vmax.xlane.f32.xlu0 %v44
    %v46 = vpop.xlane.xlu0 %45
    %v47 = vsub.f32 %v40, %v46
    %v48 = vsub.f32 %v41, %v46
    %v49 = vmul.f32 %v47, 1.442695
    %v50 = vpow.pop %v49
    %v51 = vmul.f32 %v48, 1.442695
    %v52 = vpow.pop %v51
    %v53 = vadd.f32 %v50, %v52
    %54 = vadd.xlane.f32.xlu0 %v53
    %v55 = vpop.xlane.xlu0 %54
    %v56 = vrcp.pop %v55
    %v57 = vmul.f32 %v55, %v56
    %v58 = vsub.f32 1.0, %v57
    %v59 = vmul.f32 %v56, %v58
    %v60 = vadd.f32 %v56, %v59
    %vm61 = vweird.f32 %v55
    %vm62 = vweird.f32 %v56
    %vm63 = vmor %vm61, %vm62
    %v64 = vsel %vm63, %v56, %v60
    %v65 = vand.u32 2147483647, %v55
    %vm66 = vcmp.eq.f32.partialorder %v65, 8.507059e+37
    %v67 = vand.u32 %v55, 2147483648
    %v68 = vor.u32 1.1754944e-38, %v67
    %v69 = vsel %vm66, %v68, %v64
    %v70 = vmul.f32 %v50, %v69
    %v71 = vmul.f32 %v52, %v69
    %v72 = vmax.f32 %v42, %v43
    %73 = vmax.xlane.f32.xlu0 %v72
    %v74 = vpop.xlane.xlu0 %73
    %v75 = vsub.f32 %v42, %v74
    %v76 = vsub.f32 %v43, %v74
    %v77 = vmul.f32 %v75, 1.442695
    %v78 = vpow.pop %v77
    %v79 = vmul.f32 %v76, 1.442695
    %v80 = vpow.pop %v79
    %v81 = vadd.f32 %v78, %v80
    %82 = vadd.xlane.f32.xlu0 %v81
    %v83 = vpop.xlane.xlu0 %82
    %v84 = vrcp.pop %v83
    %v85 = vmul.f32 %v83, %v84
    %v86 = vsub.f32 1.0, %v85
    %v87 = vmul.f32 %v84, %v86
    %v88 = vadd.f32 %v84, %v87
    %vm89 = vweird.f32 %v83
    %vm90 = vweird.f32 %v84
    %vm91 = vmor %vm89, %vm90
    %v92 = vsel %vm91, %v84, %v88
    %v93 = vand.u32 2147483647, %v83
    %vm94 = vcmp.eq.f32.partialorder %v93, 8.507059e+37
    %v95 = vand.u32 %v83, 2147483648
    %v96 = vor.u32 1.1754944e-38, %v95
    %v97 = vsel %vm94, %v96, %v92
    %v98 = vmul.f32 %v78, %v97
    %v99 = vmul.f32 %v80, %v97
    %v100 = vsub.f32 %v70, %v98
    %v101 = vsub.f32 %v71, %v99
    %v102 = vand.u32 2147483647, %v100
    %v103 = vand.u32 2147483647, %v101
    %v104 = vadd.f32 %v102, %v103
    %105 = vadd.xlane.f32.xlu0 %v104
    %v106 = vpop.xlane.xlu0 %105
    %v107 = vrot.slane %v106, 4
    %v108 = vadd.f32 %v106, %v107
    %v109 = vrot.slane %v108, 2
    %v110 = vadd.f32 %v108, %v109
    %v111 = vrot.slane %v110, 1
    %v112 = vadd.f32 %v110, %v111
    %s113 = vtos %v112
    %v114 = vstv %s113
    %115 = vst [vmem:[#allocation7] sm:$0xff] %v114
    // Predicated region
    $region18: #{tpu_custom_call.1} parent=1 // pred_check
      _
    $region19: #{tpu_custom_call.1} parent=1 // pred_check_branch
      %117 = sbr.rel (0) target = $region21
    $region20: #{tpu_custom_call.1} parent=1 // pred_region
      %119 = vsyncadd [#allocation4], 0
      %s121 = sshll.u32 [#allocation7], 4
      %s122 = int_to_ptr.vmem [resolvable:$true] %s121
      %s123 = sshll.u32 %s2, 4
      %s124 = int_to_ptr.hbm [resolvable:$true] %s123
      %126 = dma.vmem_to_hbm [thread:$0]  %s122, 128, %s124, [#allocation4]
    $region21: #{tpu_custom_call.1} parent=1 // pred_fallthru
      _
    // Predicated region
    $region22: #{tpu_custom_call.1} parent=1 // pred_check
      _
    $region23: #{tpu_custom_call.1} parent=1 // pred_check_branch
      %128 = sbr.rel (0) target = $region25
    $region24: #{tpu_custom_call.1} parent=1 // pred_region
      %130 = dma.done [#allocation4], 128
    $region25: #{tpu_custom_call.1} parent=1 // pred_fallthru
      _
    %131 = vsyncpa [#allocation3], 1
    %132 = vsyncpa [#allocation6], 1
    %133 = vsyncpa [#allocation4], 1

</llo_original>
